<compile_context>
chip_gen: v5e
topology: v5e:2x2
jax: 0.10.0
libtpu: 0.0.40
codegen_flags: <defaults>
</compile_context>

<pallas_src>
import functools

import jax
import jax.numpy as jnp
from jax.experimental import pallas as pl
from jax.experimental.pallas import tpu as pltpu


def _round_up(x, m):
    return ((x + m - 1) // m) * m


def _chip_budgets():
    """Returns (dma_block_bytes, vmem_work_bytes, vmem_limit_bytes)."""
    vmem_cap = None
    try:
        vmem_cap = pltpu.get_tpu_info().vmem_capacity_bytes
    except Exception:
        vmem_cap = None                      # unknown API / chip: be conservative
    if vmem_cap is not None and vmem_cap > 80 * 1024 * 1024:
        # v5e / v6e class: 128 MiB VMEM, 0.8-1.4 TB/s HBM -> bigger steps pay.
        return 8 << 20, 40 << 20, 96 << 20
    # v7x class (64 MiB per-TC VMEM) or unknown chip.
    return 4 << 20, 20 << 20, 48 << 20


def _default_tile_n(n, c, itemsize, dma_budget, work_budget):
    """Rows per grid step, sized by bytes (no fixed row cap)."""
    sub = max(8, 32 // itemsize)             # sublane multiple for this dtype
    lanes = _round_up(c, 128)                # VMEM lane padding for small C
    # Rows allowed by the HBM-transfer target (bytes actually DMA'd per step).
    rows_dma = max(sub, dma_budget // max(c * itemsize, 1))
    # Rows allowed by the VMEM working set:
    #   2x double-buffered logits block (lane-padded layout)
    # + ~3 live f32 full-tile temporaries (upcast / exp / where-gather)
    # + ~8 lane-padded column vectors (targets x2, max, lse, x_t, p, loss, acc)
    per_row_vmem = 2 * lanes * itemsize + 3 * lanes * 4 + 8 * 128 * 4
    rows_vmem = max(sub, work_budget // per_row_vmem)
    rows = min(rows_dma, rows_vmem, _round_up(n, sub))
    return max(sub, rows // sub * sub)


def _focal_loss_kernel(logits_ref, targets_ref, alpha_ref, out_ref, acc_ref,
                       *, gamma, n_rows):
    c = pl.program_id(0)                     # core-split index ("parallel")
    i = pl.program_id(1)                     # batch-tile index ("arbitrary")
    inner = pl.num_programs(1)
    tile_n = logits_ref.shape[0]

    @pl.when(i == 0)
    def _init():
        acc_ref[...] = jnp.zeros_like(acc_ref)

    x = logits_ref[...].astype(jnp.float32)      # (TILE_N, C)
    t = targets_ref[...]                         # (TILE_N, 1) int32
    a = alpha_ref[...].astype(jnp.float32)       # (1, C)

    # one-hot compare once (bool); no f32 mask materialization / multiplies
    col = jax.lax.broadcasted_iota(jnp.int32, x.shape, 1)
    is_t = col == t                              # (TILE_N, C) bool

    # log-softmax gather along C: log p_t = x_t - m - log(sum exp(x - m))
    m = jnp.max(x, axis=1, keepdims=True)                        # (TILE_N, 1)
    lse = jnp.log(jnp.sum(jnp.exp(x - m), axis=1, keepdims=True))
    x_t = jnp.sum(jnp.where(is_t, x, 0.0), axis=1, keepdims=True)
    alpha_t = jnp.sum(jnp.where(is_t, a, 0.0), axis=1, keepdims=True)

    log_p = x_t - m - lse
    p_t = jnp.exp(log_p)
    one_minus_p = 1.0 - p_t

    g_int = int(gamma)
    if float(gamma) == float(g_int) and 0 <= g_int <= 8:
        # integer power -> plain VPU multiplies, starting from one_minus_p
        if g_int == 0:
            focal_w = jnp.ones_like(one_minus_p)
        else:
            focal_w = one_minus_p
            for _ in range(g_int - 1):
                focal_w = focal_w * one_minus_p
    else:
        focal_w = jnp.power(one_minus_p, jnp.float32(gamma))

    batch_loss = -alpha_t * focal_w * log_p                      # (TILE_N, 1)

    # mask ragged last tile / clamped-duplicate tiles BEFORE accumulating
    gtile = c * inner + i
    row = gtile * tile_n + jax.lax.broadcasted_iota(
        jnp.int32, batch_loss.shape, 0)
    batch_loss = jnp.where(row < n_rows, batch_loss, 0.0)

    # per-row VPU accumulation into VMEM scratch (no per-step XLU reduce)
    acc_ref[...] = acc_ref[...] + batch_loss

    @pl.when(i == inner - 1)
    def _finalize():
        out_ref[...] = jnp.sum(acc_ref[...], axis=0,
                               keepdims=True).reshape(1, 1, 1)


def focal_loss(logits, targets, alpha_vec, *, gamma=2.0, size_average=True,
               tile_n=None, n_split=2):
    """logits: (N, C); targets: (N,) int; alpha_vec: (C,) f32."""
    N, C = logits.shape
    itemsize = jnp.dtype(logits.dtype).itemsize
    dma_budget, work_budget, vmem_limit = _chip_budgets()
    sub = max(8, 32 // itemsize)             # dtype-correct sublane multiple

    if tile_n is None:
        tile_n = _default_tile_n(N, C, itemsize, dma_budget, work_budget)
    tile_n = max(sub, _round_up(int(tile_n), sub))

    total_tiles = (N + tile_n - 1) // tile_n
    n_split = max(1, min(int(n_split), total_tiles))
    inner = (total_tiles + n_split - 1) // n_split

    targets2 = targets.reshape(N, 1).astype(jnp.int32)
    alpha2 = alpha_vec.reshape(1, C).astype(jnp.float32)

    kernel = functools.partial(_focal_loss_kernel, gamma=float(gamma),
                               n_rows=N)

    def _tile_idx(c, i):
        # clamp: trailing steps of the last split re-read the final valid
        # tile; their rows are fully masked in-kernel (contribute 0)
        return jnp.minimum(c * inner + i, total_tiles - 1)

    out = pl.pallas_call(
        kernel,
        out_shape=jax.ShapeDtypeStruct((n_split, 1, 1), jnp.float32),
        grid=(n_split, inner),
        in_specs=[
            pl.BlockSpec((tile_n, C), lambda c, i: (_tile_idx(c, i), 0)),
            pl.BlockSpec((tile_n, 1), lambda c, i: (_tile_idx(c, i), 0)),
            pl.BlockSpec((1, C), lambda c, i: (0, 0)),       # alpha, resident
        ],
        out_specs=pl.BlockSpec((1, 1, 1), lambda c, i: (c, 0, 0)),
        scratch_shapes=[pltpu.VMEM((tile_n, 1), jnp.float32)],
        compiler_params=pltpu.CompilerParams(
            dimension_semantics=("parallel", "arbitrary"),
            vmem_limit_bytes=vmem_limit),
    )(logits, targets2, alpha2)              # logits kept in original dtype

    total = jnp.sum(out)                     # sum the per-core partial sums
    if size_average:
        total = total / jnp.float32(N)
    return total


class FocalLossPallas:
    """Mirrors the PyTorch FocalLoss module (scalar alpha -> per-class vec)."""

    def __init__(self, class_num, alpha=0.5, gamma=2, size_average=True):
        if alpha is None:
            self.alpha = jnp.ones((class_num,), jnp.float32)
        elif isinstance(alpha, (jnp.ndarray, jax.Array)):
            self.alpha = jnp.asarray(alpha, jnp.float32).reshape(-1)
        else:
            self.alpha = float(alpha) * jnp.ones((class_num,), jnp.float32)
        self.gamma = float(gamma)
        self.class_num = class_num
        self.size_average = size_average

    def __call__(self, inputs, targets):
        return focal_loss(inputs, targets, self.alpha,
                          gamma=self.gamma, size_average=self.size_average)


def _ref_focal(logits, targets, alpha_vec, gamma, size_average):
    p = jax.nn.softmax(logits.astype(jnp.float32), axis=1)
    p_t = p[jnp.arange(logits.shape[0]), targets]
    a_t = alpha_vec[targets]
    bl = -a_t * (1.0 - p_t) ** gamma * jnp.log(p_t)
    return jnp.mean(bl) if size_average else jnp.sum(bl)


if __name__ == "__main__":
    key = jax.random.PRNGKey(0)
    k_x, k_t, k_x2, k_t2, k_x3, k_t3 = jax.random.split(key, 6)

    # case 1: N=8, C=16, mean reduction (single tile, single split)
    N, C = 8, 16
    logits = jax.random.normal(k_x, (N, C), dtype=jnp.float32)
    targets = jax.random.randint(k_t, (N,), 0, C, dtype=jnp.int32)
    loss_fn = FocalLossPallas(class_num=C, alpha=0.5, gamma=2,
                              size_average=True)
    loss = loss_fn(logits, targets)
    jax.block_until_ready(loss)
    ref = _ref_focal(logits, targets, loss_fn.alpha, 2.0, True)
    assert jnp.allclose(loss, ref, atol=1e-5, rtol=1e-5), (loss, ref)

    # case 2: N=20, C=16, sum reduction, forced tile_n=8
    # -> 2-way core split + ragged (masked) last tile + clamped duplicate tile
    N2 = 20
    logits2 = jax.random.normal(k_x2, (N2, C), dtype=jnp.float32)
    targets2 = jax.random.randint(k_t2, (N2,), 0, C, dtype=jnp.int32)
    loss_fn2 = FocalLossPallas(class_num=C, alpha=0.25, gamma=2,
                               size_average=False)
    loss2 = focal_loss(logits2, targets2, loss_fn2.alpha,
                       gamma=loss_fn2.gamma, size_average=False, tile_n=8)
    jax.block_until_ready(loss2)
    ref2 = _ref_focal(logits2, targets2, loss_fn2.alpha, 2.0, False)
    assert jnp.allclose(loss2, ref2, atol=1e-4, rtol=1e-5), (loss2, ref2)

    # case 3: bf16 logits (half the HBM bytes), mean reduction
    N3 = 32
    logits3 = jax.random.normal(k_x3, (N3, C), dtype=jnp.float32).astype(
        jnp.bfloat16)
    targets3 = jax.random.randint(k_t3, (N3,), 0, C, dtype=jnp.int32)
    loss_fn3 = FocalLossPallas(class_num=C, alpha=0.5, gamma=2,
                               size_average=True)
    loss3 = loss_fn3(logits3, targets3)
    jax.block_until_ready(loss3)
    ref3 = _ref_focal(logits3, targets3, loss_fn3.alpha, 2.0, True)
    assert jnp.allclose(loss3, ref3, atol=1e-5, rtol=1e-5), (loss3, ref3)

    print("KERNEL_OK")
</pallas_src>

<mosaic_0001>
module attributes {stable_mosaic.version = 11 : i64} {
  func.func @_focal_loss_kernel(%arg0: i32, %arg1: i32, %arg2: memref<8x16xf32, #tpu.memory_space<vmem>>, %arg3: memref<8x1xi32, #tpu.memory_space<vmem>>, %arg4: memref<1x16xf32, #tpu.memory_space<vmem>>, %arg5: memref<1x1x1xf32, #tpu.memory_space<vmem>>, %arg6: memref<8x1xf32, #tpu.memory_space<vmem>>) attributes {dimension_semantics = [#tpu.dimension_semantics<parallel>, #tpu.dimension_semantics<arbitrary>], iteration_bounds = array<i64: 1, 1>, scalar_prefetch = 0 : i64, scratch_operands = 1 : i64, tpu.core_type = #tpu.core_type<tc>, window_params = [{transform_indices = @transform_0, window_bounds = array<i64: 8, 16>}, {transform_indices = @transform_1, window_bounds = array<i64: 8, 1>}, {pipeline_mode = #tpu.pipeline_mode<synchronous>, transform_indices = @transform_2, window_bounds = array<i64: 1, 16>}, {transform_indices = @transform_3, window_bounds = array<i64: 1, 1, 1>}]} {
    %c0_i32 = arith.constant 0 : i32
    %0 = arith.cmpi eq, %arg1, %c0_i32 : i32
    %1 = arith.extui %0 : i1 to i32
    %c0_i32_0 = arith.constant 0 : i32
    %2 = arith.cmpi ne, %1, %c0_i32_0 : i32
    scf.if %2 {
      %cst_21 = arith.constant 0.000000e+00 : f32
      %53 = vector.broadcast %cst_21 : f32 to vector<8x1xf32>
      %c0_22 = arith.constant 0 : index
      %c0_23 = arith.constant 0 : index
      %54 = vector.load %arg6[%c0_22, %c0_23] : memref<8x1xf32, #tpu.memory_space<vmem>>, vector<8x1xf32>
      tpu.vector_store %arg6[%c0_22, %c0_23], %53 {strides = array<i32>} : memref<8x1xf32, #tpu.memory_space<vmem>>, vector<8x1xf32>,
    } else {
    }
    %c0 = arith.constant 0 : index
    %c0_1 = arith.constant 0 : index
    %3 = vector.load %arg2[%c0, %c0_1] : memref<8x16xf32, #tpu.memory_space<vmem>>, vector<8x16xf32>
    %c0_2 = arith.constant 0 : index
    %c0_3 = arith.constant 0 : index
    %4 = vector.load %arg3[%c0_2, %c0_3] : memref<8x1xi32, #tpu.memory_space<vmem>>, vector<8x1xi32>
    %c0_4 = arith.constant 0 : index
    %c0_5 = arith.constant 0 : index
    %5 = vector.load %arg4[%c0_4, %c0_5] : memref<1x16xf32, #tpu.memory_space<vmem>>, vector<1x16xf32>
    %6 = tpu.iota {dimensions = array<i32: 1>} : vector<8x16xi32>
    %7 = vector.broadcast %4 : vector<8x1xi32> to vector<8x16xi32>
    %8 = arith.cmpi eq, %6, %7 : vector<8x16xi32>
    %cst = arith.constant dense<0xFF800000> : vector<8xf32>
    %9 = vector.multi_reduction <maximumf>, %3, %cst [1] : vector<8x16xf32> to vector<8xf32>
    %10 = vector.shape_cast %9 : vector<8xf32> to vector<8x1xf32>
    %11 = vector.broadcast %10 : vector<8x1xf32> to vector<8x16xf32>
    %12 = arith.subf %3, %11 : vector<8x16xf32>
    %13 = math.exp %12 : vector<8x16xf32>
    %cst_6 = arith.constant dense<0.000000e+00> : vector<8xf32>
    %14 = vector.multi_reduction <add>, %13, %cst_6 [1] : vector<8x16xf32> to vector<8xf32>
    %15 = vector.shape_cast %14 : vector<8xf32> to vector<8x1xf32>
    %16 = math.log %15 : vector<8x1xf32>
    %cst_7 = arith.constant 0.000000e+00 : f32
    %17 = vector.broadcast %cst_7 : f32 to vector<8x16xf32>
    %18 = arith.select %8, %3, %17 : vector<8x16xi1>, vector<8x16xf32>
    %cst_8 = arith.constant dense<0.000000e+00> : vector<8xf32>
    %19 = vector.multi_reduction <add>, %18, %cst_8 [1] : vector<8x16xf32> to vector<8xf32>
    %20 = vector.shape_cast %19 : vector<8xf32> to vector<8x1xf32>
    %cst_9 = arith.constant 0.000000e+00 : f32
    %21 = vector.shape_cast %5 : vector<1x16xf32> to vector<1x16xf32>
    %22 = vector.broadcast %21 : vector<1x16xf32> to vector<8x16xf32>
    %23 = vector.broadcast %cst_9 : f32 to vector<8x16xf32>
    %24 = arith.select %8, %22, %23 : vector<8x16xi1>, vector<8x16xf32>
    %cst_10 = arith.constant dense<0.000000e+00> : vector<8xf32>
    %25 = vector.multi_reduction <add>, %24, %cst_10 [1] : vector<8x16xf32> to vector<8xf32>
    %26 = vector.shape_cast %25 : vector<8xf32> to vector<8x1xf32>
    %27 = arith.subf %20, %10 : vector<8x1xf32>
    %28 = arith.subf %27, %16 : vector<8x1xf32>
    %29 = math.exp %28 : vector<8x1xf32>
    %cst_11 = arith.constant 1.000000e+00 : f32
    %30 = vector.broadcast %cst_11 : f32 to vector<8x1xf32>
    %31 = arith.subf %30, %29 : vector<8x1xf32>
    %32 = arith.mulf %31, %31 : vector<8x1xf32>
    %cst_12 = arith.constant 0.000000e+00 : f32
    %33 = vector.broadcast %cst_12 : f32 to vector<8x1xf32>
    %34 = arith.subf %33, %26 : vector<8x1xf32>
    %35 = arith.mulf %34, %32 : vector<8x1xf32>
    %36 = arith.mulf %35, %28 : vector<8x1xf32>
    %c1_i32 = arith.constant 1 : i32
    %37 = arith.muli %arg0, %c1_i32 : i32
    %38 = arith.addi %37, %arg1 : i32
    %c8_i32 = arith.constant 8 : i32
    %39 = arith.muli %38, %c8_i32 : i32
    %40 = tpu.iota {dimensions = array<i32: 0>} : vector<8x1xi32>
    %41 = vector.broadcast %39 : i32 to vector<8x1xi32>
    %42 = arith.addi %41, %40 : vector<8x1xi32>
    %c8_i32_13 = arith.constant 8 : i32
    %43 = vector.broadcast %c8_i32_13 : i32 to vector<8x1xi32>
    %44 = arith.cmpi slt, %42, %43 : vector<8x1xi32>
    %cst_14 = arith.constant 0.000000e+00 : f32
    %45 = vector.broadcast %cst_14 : f32 to vector<8x1xf32>
    %46 = arith.select %44, %36, %45 : vector<8x1xi1>, vector<8x1xf32>
    %c0_15 = arith.constant 0 : index
    %c0_16 = arith.constant 0 : index
    %47 = vector.load %arg6[%c0_15, %c0_16] : memref<8x1xf32, #tpu.memory_space<vmem>>, vector<8x1xf32>
    %48 = arith.addf %47, %46 : vector<8x1xf32>
    %c0_17 = arith.constant 0 : index
    %c0_18 = arith.constant 0 : index
    %49 = vector.load %arg6[%c0_17, %c0_18] : memref<8x1xf32, #tpu.memory_space<vmem>>, vector<8x1xf32>
    tpu.vector_store %arg6[%c0_17, %c0_18], %48 {strides = array<i32>} : memref<8x1xf32, #tpu.memory_space<vmem>>, vector<8x1xf32>,
    %c0_i32_19 = arith.constant 0 : i32
    %50 = arith.cmpi eq, %arg1, %c0_i32_19 : i32
    %51 = arith.extui %50 : i1 to i32
    %c0_i32_20 = arith.constant 0 : i32
    %52 = arith.cmpi ne, %51, %c0_i32_20 : i32
    scf.if %52 {
      %c0_21 = arith.constant 0 : index
      %c0_22 = arith.constant 0 : index
      %53 = vector.load %arg6[%c0_21, %c0_22] : memref<8x1xf32, #tpu.memory_space<vmem>>, vector<8x1xf32>
      %cst_23 = arith.constant dense<0.000000e+00> : vector<1xf32>
      %54 = vector.multi_reduction <add>, %53, %cst_23 [0] : vector<8x1xf32> to vector<1xf32>
      %55 = vector.shape_cast %54 : vector<1xf32> to vector<1x1xf32>
      %56 = vector.shape_cast %55 : vector<1x1xf32> to vector<1x1x1xf32>
      %c0_24 = arith.constant 0 : index
      %c0_25 = arith.constant 0 : index
      %c0_26 = arith.constant 0 : index
      %57 = vector.load %arg5[%c0_24, %c0_25, %c0_26] : memref<1x1x1xf32, #tpu.memory_space<vmem>>, vector<1x1x1xf32>
      tpu.vector_store %arg5[%c0_24, %c0_25, %c0_26], %56 {strides = array<i32>} : memref<1x1x1xf32, #tpu.memory_space<vmem>>, vector<1x1x1xf32>,
    } else {
    }
    return
  }
  func.func @transform_0(%arg0: i32, %arg1: i32) -> (i32, i32) {
    %c1_i32 = arith.constant 1 : i32
    %0 = arith.muli %arg0, %c1_i32 : i32
    %1 = arith.addi %0, %arg1 : i32
    %c0_i32 = arith.constant 0 : i32
    %2 = arith.minsi %1, %c0_i32 : i32
    %c0_i32_0 = arith.constant 0 : i32
    %c0_i32_1 = arith.constant 0 : i32
    return %2, %c0_i32_0 : i32, i32
  }
  func.func @transform_1(%arg0: i32, %arg1: i32) -> (i32, i32) {
    %c1_i32 = arith.constant 1 : i32
    %0 = arith.muli %arg0, %c1_i32 : i32
    %1 = arith.addi %0, %arg1 : i32
    %c0_i32 = arith.constant 0 : i32
    %2 = arith.minsi %1, %c0_i32 : i32
    %c0_i32_0 = arith.constant 0 : i32
    %c0_i32_1 = arith.constant 0 : i32
    return %2, %c0_i32_0 : i32, i32
  }
  func.func @transform_2(%arg0: i32, %arg1: i32) -> (i32, i32) {
    %c0_i32 = arith.constant 0 : i32
    %c0_i32_0 = arith.constant 0 : i32
    %c0_i32_1 = arith.constant 0 : i32
    return %c0_i32, %c0_i32_0 : i32, i32
  }
  func.func @transform_3(%arg0: i32, %arg1: i32) -> (i32, i32, i32) {
    %c0_i32 = arith.constant 0 : i32
    %c0_i32_0 = arith.constant 0 : i32
    %c0_i32_1 = arith.constant 0 : i32
    return %arg0, %c0_i32, %c0_i32_0 : i32, i32, i32
  }
}

</mosaic_0001>

<llo_original>
// kernel: tpu_custom_call.1
$region0: #{tpu_custom_call.1}
  #allocation0 [shape = 'u32[]', space=smem, size = 0x4, offset = 0x4, fixed_abs, tag = 'smem constant byte address 0x4 - core index']
  #allocation1 [shape = 'u32[72,128]{1,0:T(1,128)}', space=vmem, size = 0x9000, scoped, tag = 'internal scratch']
  #allocation2 [shape = 'f32[8,1]{1,0:T(8,128)}', space=vmem, size = 0x1000, scoped, tag = 'scratch operand']
  %s0 = inlined_call_operand.vmem [shape: f32[8,16], index: 0, kind: input, shape index: {}]
  %s1 = inlined_call_operand.vmem [shape: s32[8,1], index: 1, kind: input, shape index: {}]
  %s2 = inlined_call_operand.vmem [shape: f32[1,16], index: 2, kind: input, shape index: {}]
  %s3 = inlined_call_operand.hbm [shape: f32[1,1,1], index: 3, kind: output, shape index: {}]
  %s4 = sld [smem:[#allocation0]]
  $region30: #{tpu_custom_call.1} parent=0
    _
  %s6 = ssub.s32 1, %s4
  %s7 = scalar_select 0, %s6, %s4
  $region1: #{tpu_custom_call.1} parent=0
    #allocation3 [shape = 'u8[512]{0}', space=vmem, size = 0x400, scoped, tag = 'output window, operand 0, single buffered']
    #allocation4 [shape = 's32[1]{0}', space=sflag, size = 0x4, scoped, tag = 'scoped memory for tpu_custom_call.1']
    %8 = vsyncpa [#allocation4], 0
    // Predicated region
    $region2: #{tpu_custom_call.1} parent=1 // pred_check
      _
    $region3: #{tpu_custom_call.1} parent=1 // pred_check_branch
      %10 = sbr.rel (0) target = $region5
    $region4: #{tpu_custom_call.1} parent=1 // pred_region
      %s11 = sadd.s32 0, 0
      %p12 = scmp.lt.s32.totalorder %s11, 0
      %s13 = scalar_select %p12, %s11, 0
      %p14 = scmp.lt.s32.totalorder %s13, 0
      %s15 = scalar_select %p14, %s13, 0
      %s16 = smul.addr %s15, 8
      %s17 = scalar_lea.vmem %s0, %s16
      %s18 = sadd.s32 0, 0
      %p19 = scmp.lt.s32.totalorder %s18, 0
      %s20 = scalar_select %p19, %s18, 0
    $region5: #{tpu_custom_call.1} parent=1 // pred_fallthru
      _
    // Predicated region
    $region6: #{tpu_custom_call.1} parent=1 // pred_check
      _
    $region7: #{tpu_custom_call.1} parent=1 // pred_check_branch
      %22 = sbr.rel (0) target = $region9
    $region8: #{tpu_custom_call.1} parent=1 // pred_region
      %s23 = sadd.s32 0, 0
      %p24 = scmp.lt.s32.totalorder %s23, 0
      %s25 = scalar_select %p24, %s23, 0
      %p26 = scmp.lt.s32.totalorder %s25, 0
      %s27 = scalar_select %p26, %s25, 0
      %s28 = smul.addr %s27, 8
      %s29 = scalar_lea.vmem %s1, %s28
      %s30 = sadd.s32 0, 0
      %p31 = scmp.lt.s32.totalorder %s30, 0
      %s32 = scalar_select %p31, %s30, 0
    $region9: #{tpu_custom_call.1} parent=1 // pred_fallthru
      _
    // Predicated region
    $region10: #{tpu_custom_call.1} parent=1 // pred_check
      _
    $region11: #{tpu_custom_call.1} parent=1 // pred_check_branch
      %34 = sbr.rel (0) target = $region13
    $region12: #{tpu_custom_call.1} parent=1 // pred_region
      _
    $region13: #{tpu_custom_call.1} parent=1 // pred_fallthru
      _
    %s35 = sadd.s32 0, 0
    %p36 = scmp.lt.s32.totalorder %s35, 0
    %s37 = scalar_select %p36, %s35, 0
    %p38 = scmp.lt.s32.totalorder %s37, 0
    %s39 = scalar_select %p38, %s37, 0
    %s40 = smul.addr %s39, 8
    %s41 = scalar_lea.vmem %s0, %s40
    %s42 = sadd.s32 0, 0
    %p43 = scmp.lt.s32.totalorder %s42, 0
    %s44 = scalar_select %p43, %s42, 0
    %p45 = scmp.lt.s32.totalorder %s44, 0
    %s46 = scalar_select %p45, %s44, 0
    %s47 = smul.addr %s46, 8
    %s48 = scalar_lea.vmem %s1, %s47
    %s49 = sadd.s32 0, 0
    %p50 = scmp.lt.s32.totalorder %s49, 0
    %s51 = scalar_select %p50, %s49, 0
    %p52 = scmp.lt.s32.totalorder %s51, 0
    %s53 = scalar_select %p52, %s51, 0
    %s54 = smul.addr %s53, 8
    %s55 = scalar_lea.vmem %s0, %s54
    %s56 = sadd.s32 0, 0
    %p57 = scmp.lt.s32.totalorder %s56, 0
    %s58 = scalar_select %p57, %s56, 0
    %s59 = sadd.s32 0, 0
    %p60 = scmp.lt.s32.totalorder %s59, 0
    %s61 = scalar_select %p60, %s59, 0
    %p62 = scmp.lt.s32.totalorder %s61, 0
    %s63 = scalar_select %p62, %s61, 0
    %s64 = smul.addr %s63, 8
    %s65 = scalar_lea.vmem %s1, %s64
    %s66 = sadd.s32 0, 0
    %p67 = scmp.lt.s32.totalorder %s66, 0
    %s68 = scalar_select %p67, %s66, 0
    %p69 = scmp.eq.s32.totalorder 0, 0
    // Predicated region
    $region14: #{tpu_custom_call.1} parent=1 // pred_check
      %p70 = pneg %p69
    $region15: #{tpu_custom_call.1} parent=1 // pred_check_branch
      %72 = sbr.rel (%p70) target = $region17
    $region16: #{tpu_custom_call.1} parent=1 // pred_region
      %vm73 = vcmask 7168
      %74 = vst.msk [vmem:[#allocation2] sm:$0xff] %vm73, 0.0
    $region17: #{tpu_custom_call.1} parent=1 // pred_fallthru
      _
    %v75 = vld [vmem:[%s55] sm:$0xff]
    %v76 = vld [vmem:[%s65] sm:$0xff]
    %v77 = vld [vmem:[%s2] sm:$0x1]
    %v78 = vlaneseq
    %v79 = vand.u32 %v78, 127
    %80 = vset.pattern.permute.xlu0 0
    %81 = vperm.xlu0 %80, %v76
    %v82 = vpop.permute.xlu0 %81
    %vm83 = vcmp.eq.s32.totalorder %v79, %v82
    %vm84 = vcmask 130048
    %v85 = vsel %vm84, %v75, -inf
    %86 = vmax.xlane.f32.xlu0 %v85
    %v87 = vpop.xlane.xlu0 %86
    %v88 = vsub.f32 %v75, %v87
    %v89 = vmul.f32 %v88, 1.442695
    %v90 = vpow.pop %v89
    %v91 = vsel %vm84, %v90, 0.0
    %92 = vadd.xlane.f32.xlu0 %v91
    %v93 = vpop.xlane.xlu0 %92
    %v94 = vlog2.pop %v93
    %v95 = vmul.f32 %v94, 0.6931472
    %v96 = vsel %vm83, %v75, 0.0
    %v97 = vsel %vm84, %v96, 0.0
    %98 = vadd.xlane.f32.xlu0 %v97
    %v99 = vpop.xlane.xlu0 %98
    %v101 = vperm.slane %v77, 0
    %v103 = vsel %vm83, %v101, 0.0
    %v104 = vsel %vm84, %v103, 0.0
    %105 = vadd.xlane.f32.xlu0 %v104
    %v106 = vpop.xlane.xlu0 %105
    %v107 = vsub.f32 %v99, %v87
    %v108 = vsub.f32 %v107, %v95
    %v109 = vmul.f32 %v108, 1.442695
    %v110 = vpow.pop %v109
    %v111 = vsub.f32 1.0, %v110
    %v112 = vmul.f32 %v111, %v111
    %v113 = vsub.f32 0.0, %v106
    %v114 = vmul.f32 %v113, %v112
    %v115 = vmul.f32 %v114, %v108
    %s116 = sadd.s32 0, 0
    %s117 = smul.u32 %s116, 8
    %v118 = vlaneseq
    %v119 = vshrl.u32 %v118, 7
    %v120 = vstv %s117
    %v121 = vadd.s32 %v120, %v119
    %vm122 = vcmp.lt.s32.totalorder %v121, 8
    %v123 = vsel %vm122, %v115, 0.0
    %v124 = vld [vmem:[#allocation2] sm:$0xff]
    %v125 = vadd.f32 %v124, %v123
    %vm126 = vcmask 7168
    %127 = vst.msk [vmem:[#allocation2] sm:$0xff] %vm126, %v125
    // Predicated region
    $region18: #{tpu_custom_call.1} parent=1 // pred_check
      %p128 = pneg %p69
    $region19: #{tpu_custom_call.1} parent=1 // pred_check_branch
      %130 = sbr.rel (%p128) target = $region21
    $region20: #{tpu_custom_call.1} parent=1 // pred_region
      %v131 = vld [vmem:[#allocation2] sm:$0xff]
      %v132 = vsel %vm126, %v131, 0.0
      %v133 = vrot.slane %v132, 4
      %v134 = vadd.f32 %v132, %v133
      %v135 = vrot.slane %v134, 2
      %v136 = vadd.f32 %v134, %v135
      %v137 = vrot.slane %v136, 1
      %v138 = vadd.f32 %v136, %v137
      %vm139 = vcmask 0
      %140 = vst.msk [vmem:[#allocation3] sm:$0x1] %vm139, %v138
    $region21: #{tpu_custom_call.1} parent=1 // pred_fallthru
      _
    // Predicated region
    $region22: #{tpu_custom_call.1} parent=1 // pred_check
      _
    $region23: #{tpu_custom_call.1} parent=1 // pred_check_branch
      %142 = sbr.rel (0) target = $region25
    $region24: #{tpu_custom_call.1} parent=1 // pred_region
      %144 = vsyncadd [#allocation4], 0
      %s146 = sshll.u32 [#allocation3], 4
      %s147 = int_to_ptr.vmem [resolvable:$true] %s146
      %s148 = sshll.u32 %s3, 4
      %s149 = int_to_ptr.hbm [resolvable:$true] %s148
      %151 = dma.vmem_to_hbm [thread:$0]  %s147, 16, %s149, [#allocation4]
    $region25: #{tpu_custom_call.1} parent=1 // pred_fallthru
      _
    // Predicated region
    $region26: #{tpu_custom_call.1} parent=1 // pred_check
      _
    $region27: #{tpu_custom_call.1} parent=1 // pred_check_branch
      %153 = sbr.rel (0) target = $region29
    $region28: #{tpu_custom_call.1} parent=1 // pred_region
      %155 = dma.done [#allocation4], 16
    $region29: #{tpu_custom_call.1} parent=1 // pred_fallthru
      _
    %156 = vsyncpa [#allocation4], 1

</llo_original>
